<compile_context>
chip_gen: v5e
topology: v5e:2x2
jax: 0.10.0
libtpu: 0.0.40
codegen_flags: <defaults>
</compile_context>

<pallas_src>
import jax
import jax.numpy as jnp
from jax.experimental import pallas as pl
from jax.experimental.pallas import tpu as pltpu


def _round_up(x, m):
    return ((x + m - 1) // m) * m


def _gcn_layer_kernel(adj_ref, h_ref, w_ref, b_ref, out_ref, acc_ref):
    """out[i] = leaky_relu( (sum_k adj[i,k] @ h[k]) @ W + b , 0.25 )."""
    k = pl.program_id(1)

    @pl.when(k == 0)
    def _():
        acc_ref[...] = jnp.zeros_like(acc_ref)

    # Streamed N^2 aggregation: bf16 x bf16 operands, f32 accumulation on MXU.
    acc_ref[...] += jnp.dot(adj_ref[...], h_ref[...],
                            preferred_element_type=jnp.float32)

    @pl.when(k == pl.num_programs(1) - 1)
    def _():
        # Epilogue in f32: apply weight, bias, leaky_relu(0.25), then cast.
        z = jnp.dot(acc_ref[...], w_ref[...],
                    preferred_element_type=jnp.float32) + b_ref[...]
        out_ref[...] = jnp.where(z > 0, z, 0.25 * z).astype(out_ref.dtype)


def _gcn_layer(adj_p, h_p, w_p, b_p, *, out_dtype, tm, tk):
    """One GCN layer on padded operands.

    adj_p: [Npad, Npad] bf16, h_p: [Npad, Cin_pad] bf16,
    w_p: [Cin_pad, Cout_pad] f32, b_p: [1, Cout_pad] f32.
    """
    npad = adj_p.shape[0]
    c_in_pad = h_p.shape[1]
    c_out_pad = w_p.shape[1]
    grid = (npad // tm, npad // tk)

    return pl.pallas_call(
        _gcn_layer_kernel,
        out_shape=jax.ShapeDtypeStruct((npad, c_out_pad), out_dtype),
        grid_spec=pltpu.PrefetchScalarGridSpec(
            num_scalar_prefetch=0,
            grid=grid,
            in_specs=[
                pl.BlockSpec((tm, tk), lambda i, k: (i, k)),            # adj tile
                pl.BlockSpec((tk, c_in_pad), lambda i, k: (k, 0)),      # h tile
                pl.BlockSpec((c_in_pad, c_out_pad), lambda i, k: (0, 0)),  # W
                pl.BlockSpec((1, c_out_pad), lambda i, k: (0, 0)),      # b
            ],
            out_specs=pl.BlockSpec((tm, c_out_pad), lambda i, k: (i, 0)),
            scratch_shapes=[pltpu.VMEM((tm, c_in_pad), jnp.float32)],
        ),
        compiler_params=pltpu.CompilerParams(
            dimension_semantics=("parallel", "arbitrary"),
            vmem_limit_bytes=32 * 1024 * 1024,
        ),
    )(adj_p, h_p, w_p, b_p)


def gcn_forward(x, adj, params):
    """x: [N, C_in] f32, adj: [N, N] f32, params: dict w1,b1,w2,b2,w3,b3."""
    n, c_in = x.shape
    c1 = params["w1"].shape[1]
    c2 = params["w2"].shape[1]
    c3 = params["w3"].shape[1]

    LANE = 128
    npad = _round_up(max(n, LANE), LANE)
    # Generation-safe tile plan (budgeted for v7x's 64 MiB VMEM; also fine on
    # v5e/v6e): adj tiles <= (256, 2048) bf16 = 1 MiB per buffer.
    tm = 256 if npad % 256 == 0 else 128
    tk = next(t for t in (2048, 1024, 512, 256, 128) if npad % t == 0)

    cins = [c_in, c1, c2]
    couts = [c1, c2, c3]
    cin_pads = [_round_up(c, LANE) for c in cins]
    cout_pads = [_round_up(c, LANE) for c in couts]

    # Pad + cast once at the boundary: adj / activations in bf16 (MXU stream
    # operands), weights & biases kept f32 (epilogue stays f32).
    adj_p = jnp.zeros((npad, npad), jnp.bfloat16)
    adj_p = adj_p.at[:n, :n].set(adj.astype(jnp.bfloat16))
    h = jnp.zeros((npad, cin_pads[0]), jnp.bfloat16)
    h = h.at[:n, :c_in].set(x.astype(jnp.bfloat16))

    for layer in range(3):
        w = params[f"w{layer + 1}"]
        b = params[f"b{layer + 1}"]
        w_p = jnp.zeros((cin_pads[layer], cout_pads[layer]), jnp.float32)
        w_p = w_p.at[: w.shape[0], : w.shape[1]].set(w)
        b_p = jnp.zeros((1, cout_pads[layer]), jnp.float32)
        b_p = b_p.at[0, : b.shape[0]].set(b)

        out_dtype = jnp.float32 if layer == 2 else jnp.bfloat16
        h = _gcn_layer(adj_p, h, w_p, b_p, out_dtype=out_dtype, tm=tm, tk=tk)
        # dropout: eval-mode identity (see TODO at top of file).

    return h[:n, :c3]


def gcn_reference(x, adj, params):
    """Pure-JAX f32 reference mirroring the PyTorch forward (eval mode)."""
    h = x
    for i in range(1, 4):
        h = adj @ (h @ params[f"w{i}"]) + params[f"b{i}"]
        h = jnp.where(h > 0, h, 0.25 * h)
    return h


def init_params(key, in_channels, out_channels):
    """Xavier-normal weights, zero biases (mirrors GCN_layer.__init__)."""
    dims = [in_channels] + list(out_channels)
    params = {}
    for i in range(3):
        key, sub = jax.random.split(key)
        fan_in, fan_out = dims[i], dims[i + 1]
        std = (2.0 / (fan_in + fan_out)) ** 0.5
        params[f"w{i + 1}"] = std * jax.random.normal(
            sub, (fan_in, fan_out), jnp.float32)
        params[f"b{i + 1}"] = jnp.zeros((fan_out,), jnp.float32)
    return params


if __name__ == "__main__":
    key = jax.random.PRNGKey(0)

    num_nodes = 8
    in_channels = 16
    out_channels = [32, 16, 8]

    k_x, k_adj, k_p = jax.random.split(key, 3)
    x = jax.random.normal(k_x, (num_nodes, in_channels), jnp.float32)

    # Symmetric, row-normalized adjacency with self-loops (typical GCN adj).
    a = (jax.random.uniform(k_adj, (num_nodes, num_nodes)) > 0.5).astype(jnp.float32)
    a = jnp.maximum(a, a.T) + jnp.eye(num_nodes, dtype=jnp.float32)
    adj = a / jnp.sum(a, axis=1, keepdims=True)

    params = init_params(k_p, in_channels, out_channels)

    out = gcn_forward(x, adj, params)
    jax.block_until_ready(out)

    assert out.shape == (num_nodes, out_channels[-1])
    assert bool(jnp.all(jnp.isfinite(out)))

    ref = gcn_reference(x, adj, params)
    max_err = float(jnp.max(jnp.abs(out - ref)))
    assert max_err < 5e-2, f"max abs error vs reference: {max_err}"

    print("KERNEL_OK")
</pallas_src>

<mosaic_0001>
module attributes {stable_mosaic.version = 11 : i64} {
  func.func @_gcn_layer_kernel(%arg0: i32, %arg1: i32, %arg2: memref<128x128xbf16, #tpu.memory_space<vmem>>, %arg3: memref<128x128xbf16, #tpu.memory_space<vmem>>, %arg4: memref<128x128xf32, #tpu.memory_space<vmem>>, %arg5: memref<1x128xf32, #tpu.memory_space<vmem>>, %arg6: memref<128x128xbf16, #tpu.memory_space<vmem>>, %arg7: memref<128x128xf32, #tpu.memory_space<vmem>>) attributes {dimension_semantics = [#tpu.dimension_semantics<parallel>, #tpu.dimension_semantics<arbitrary>], iteration_bounds = array<i64: 1, 1>, scalar_prefetch = 0 : i64, scratch_operands = 1 : i64, tpu.core_type = #tpu.core_type<tc>, window_params = [{transform_indices = @transform_0, window_bounds = array<i64: 128, 128>}, {transform_indices = @transform_1, window_bounds = array<i64: 128, 128>}, {pipeline_mode = #tpu.pipeline_mode<synchronous>, transform_indices = @transform_2, window_bounds = array<i64: 128, 128>}, {pipeline_mode = #tpu.pipeline_mode<synchronous>, transform_indices = @transform_3, window_bounds = array<i64: 1, 128>}, {transform_indices = @transform_4, window_bounds = array<i64: 128, 128>}]} {
    %c0_i32 = arith.constant 0 : i32
    %0 = arith.cmpi eq, %arg1, %c0_i32 : i32
    %1 = arith.extui %0 : i1 to i32
    %c0_i32_0 = arith.constant 0 : i32
    %2 = arith.cmpi ne, %1, %c0_i32_0 : i32
    scf.if %2 {
      %cst_10 = arith.constant 0.000000e+00 : f32
      %12 = vector.broadcast %cst_10 : f32 to vector<128x128xf32>
      %c0_11 = arith.constant 0 : index
      %c0_12 = arith.constant 0 : index
      %13 = vector.load %arg7[%c0_11, %c0_12] : memref<128x128xf32, #tpu.memory_space<vmem>>, vector<128x128xf32>
      tpu.vector_store %arg7[%c0_11, %c0_12], %12 {strides = array<i32>} : memref<128x128xf32, #tpu.memory_space<vmem>>, vector<128x128xf32>,
    } else {
    }
    %c0 = arith.constant 0 : index
    %c0_1 = arith.constant 0 : index
    %3 = vector.load %arg7[%c0, %c0_1] : memref<128x128xf32, #tpu.memory_space<vmem>>, vector<128x128xf32>
    %c0_2 = arith.constant 0 : index
    %c0_3 = arith.constant 0 : index
    %4 = vector.load %arg2[%c0_2, %c0_3] : memref<128x128xbf16, #tpu.memory_space<vmem>>, vector<128x128xbf16>
    %c0_4 = arith.constant 0 : index
    %c0_5 = arith.constant 0 : index
    %5 = vector.load %arg3[%c0_4, %c0_5] : memref<128x128xbf16, #tpu.memory_space<vmem>>, vector<128x128xbf16>
    %cst = arith.constant dense<0.000000e+00> : vector<128x128xf32>
    %6 = tpu.matmul %4, %5, %cst {dimension_numbers = #tpu.dot_dimension_numbers<[1], [0], [0], [1], [0, 0, 1, 1], [], []>} : vector<128x128xbf16>, vector<128x128xbf16>, vector<128x128xf32> -> vector<128x128xf32>
    %7 = arith.addf %3, %6 : vector<128x128xf32>
    %c0_6 = arith.constant 0 : index
    %c0_7 = arith.constant 0 : index
    %8 = vector.load %arg7[%c0_6, %c0_7] : memref<128x128xf32, #tpu.memory_space<vmem>>, vector<128x128xf32>
    tpu.vector_store %arg7[%c0_6, %c0_7], %7 {strides = array<i32>} : memref<128x128xf32, #tpu.memory_space<vmem>>, vector<128x128xf32>,
    %c0_i32_8 = arith.constant 0 : i32
    %9 = arith.cmpi eq, %arg1, %c0_i32_8 : i32
    %10 = arith.extui %9 : i1 to i32
    %c0_i32_9 = arith.constant 0 : i32
    %11 = arith.cmpi ne, %10, %c0_i32_9 : i32
    scf.if %11 {
      %c0_10 = arith.constant 0 : index
      %c0_11 = arith.constant 0 : index
      %12 = vector.load %arg7[%c0_10, %c0_11] : memref<128x128xf32, #tpu.memory_space<vmem>>, vector<128x128xf32>
      %c0_12 = arith.constant 0 : index
      %c0_13 = arith.constant 0 : index
      %13 = vector.load %arg4[%c0_12, %c0_13] : memref<128x128xf32, #tpu.memory_space<vmem>>, vector<128x128xf32>
      %cst_14 = arith.constant dense<0.000000e+00> : vector<128x128xf32>
      %14 = tpu.matmul %12, %13, %cst_14 {dimension_numbers = #tpu.dot_dimension_numbers<[1], [0], [0], [1], [0, 0, 1, 1], [], []>} : vector<128x128xf32>, vector<128x128xf32>, vector<128x128xf32> -> vector<128x128xf32>
      %c0_15 = arith.constant 0 : index
      %c0_16 = arith.constant 0 : index
      %15 = vector.load %arg5[%c0_15, %c0_16] : memref<1x128xf32, #tpu.memory_space<vmem>>, vector<1x128xf32>
      %16 = vector.broadcast %15 : vector<1x128xf32> to vector<128x128xf32>
      %17 = arith.addf %14, %16 : vector<128x128xf32>
      %cst_17 = arith.constant 0.000000e+00 : f32
      %18 = vector.broadcast %cst_17 : f32 to vector<128x128xf32>
      %19 = arith.cmpf ogt, %17, %18 : vector<128x128xf32>
      %cst_18 = arith.constant 2.500000e-01 : f32
      %20 = vector.broadcast %cst_18 : f32 to vector<128x128xf32>
      %21 = arith.mulf %20, %17 : vector<128x128xf32>
      %22 = arith.select %19, %17, %21 : vector<128x128xi1>, vector<128x128xf32>
      %23 = arith.truncf %22 : vector<128x128xf32> to vector<128x128xbf16>
      %c0_19 = arith.constant 0 : index
      %c0_20 = arith.constant 0 : index
      %24 = vector.load %arg6[%c0_19, %c0_20] : memref<128x128xbf16, #tpu.memory_space<vmem>>, vector<128x128xbf16>
      tpu.vector_store %arg6[%c0_19, %c0_20], %23 {strides = array<i32>} : memref<128x128xbf16, #tpu.memory_space<vmem>>, vector<128x128xbf16>,
    } else {
    }
    return
  }
  func.func @transform_0(%arg0: i32, %arg1: i32) -> (i32, i32) {
    %c0_i32 = arith.constant 0 : i32
    return %arg0, %arg1 : i32, i32
  }
  func.func @transform_1(%arg0: i32, %arg1: i32) -> (i32, i32) {
    %c0_i32 = arith.constant 0 : i32
    %c0_i32_0 = arith.constant 0 : i32
    return %arg1, %c0_i32 : i32, i32
  }
  func.func @transform_2(%arg0: i32, %arg1: i32) -> (i32, i32) {
    %c0_i32 = arith.constant 0 : i32
    %c0_i32_0 = arith.constant 0 : i32
    %c0_i32_1 = arith.constant 0 : i32
    return %c0_i32, %c0_i32_0 : i32, i32
  }
  func.func @transform_3(%arg0: i32, %arg1: i32) -> (i32, i32) {
    %c0_i32 = arith.constant 0 : i32
    %c0_i32_0 = arith.constant 0 : i32
    %c0_i32_1 = arith.constant 0 : i32
    return %c0_i32, %c0_i32_0 : i32, i32
  }
  func.func @transform_4(%arg0: i32, %arg1: i32) -> (i32, i32) {
    %c0_i32 = arith.constant 0 : i32
    %c0_i32_0 = arith.constant 0 : i32
    return %arg0, %c0_i32 : i32, i32
  }
}

</mosaic_0001>

<llo_original>
// kernel: tpu_custom_call.1
$region0: #{tpu_custom_call.1}
  #allocation0 [shape = 'u32[]', space=smem, size = 0x4, offset = 0x4, fixed_abs, tag = 'smem constant byte address 0x4 - core index']
  #allocation1 [shape = 'u32[72,128]{1,0:T(1,128)}', space=vmem, size = 0x9000, scoped, tag = 'internal scratch']
  #allocation2 [shape = 'f32[128,128]{1,0:T(8,128)}', space=vmem, size = 0x10000, scoped, tag = 'scratch operand']
  %s0 = inlined_call_operand.hbm [shape: bf16[128,128], index: 0, kind: input, shape index: {}]
  %s1 = inlined_call_operand.hbm [shape: bf16[128,128], index: 1, kind: input, shape index: {}]
  %s2 = inlined_call_operand.hbm [shape: f32[128,128], index: 2, kind: input, shape index: {}]
  %s3 = inlined_call_operand.vmem [shape: f32[1,128], index: 3, kind: input, shape index: {}]
  %s4 = inlined_call_operand.hbm [shape: bf16[128,128], index: 4, kind: output, shape index: {}]
  %s5 = sld [smem:[#allocation0]]
  $region46: #{tpu_custom_call.1} parent=0
    _
  %s7 = ssub.s32 1, %s5
  %s8 = scalar_select 0, %s7, %s5
  $region1: #{tpu_custom_call.1} parent=0
    #allocation3 [shape = 'u8[32768]{0}', space=vmem, size = 0x8000, scoped, tag = 'input window, operand 0, single buffered']
    #allocation4 [shape = 's32[1]{0}', space=sflag, size = 0x4, scoped, tag = 'scoped memory for tpu_custom_call.1']
    #allocation5 [shape = 's32[1]{0}', space=sflag, size = 0x4, scoped, tag = 'scoped memory for tpu_custom_call.1']
    #allocation6 [shape = 'u8[32768]{0}', space=vmem, size = 0x8000, scoped, tag = 'input window, operand 1, single buffered']
    #allocation7 [shape = 's32[1]{0}', space=sflag, size = 0x4, scoped, tag = 'scoped memory for tpu_custom_call.1']
    #allocation8 [shape = 'u8[65536]{0}', space=vmem, size = 0x10000, scoped, tag = 'input window, operand 2, single buffered']
    #allocation9 [shape = 'u8[32768]{0}', space=vmem, size = 0x8000, scoped, tag = 'output window, operand 0, single buffered']
    %9 = vsyncpa [#allocation4], 0
    %10 = vsyncpa [#allocation7], 0
    %11 = vsyncpa [#allocation5], 0
    // Predicated region
    $region2: #{tpu_custom_call.1} parent=1 // pred_check
      _
    $region3: #{tpu_custom_call.1} parent=1 // pred_check_branch
      %13 = sbr.rel (0) target = $region5
    $region4: #{tpu_custom_call.1} parent=1 // pred_region
      %15 = vsyncadd [#allocation4], 0
      %s16 = sshll.u32 %s0, 4
      %s17 = int_to_ptr.hbm [resolvable:$true] %s16
      %s18 = sshll.u32 [#allocation3], 4
      %s19 = int_to_ptr.vmem [resolvable:$true] %s18
      %24 = dma.hbm_to_vmem [thread:$0]  %s17, 1024, %s19, [#allocation4], 64, 64, 4
    $region5: #{tpu_custom_call.1} parent=1 // pred_fallthru
      _
    // Predicated region
    $region6: #{tpu_custom_call.1} parent=1 // pred_check
      _
    $region7: #{tpu_custom_call.1} parent=1 // pred_check_branch
      %26 = sbr.rel (0) target = $region9
    $region8: #{tpu_custom_call.1} parent=1 // pred_region
      %28 = vsyncadd [#allocation7], 0
      %s29 = sshll.u32 %s1, 4
      %s30 = int_to_ptr.hbm [resolvable:$true] %s29
      %s31 = sshll.u32 [#allocation6], 4
      %s32 = int_to_ptr.vmem [resolvable:$true] %s31
      %37 = dma.hbm_to_vmem [thread:$0]  %s30, 1024, %s32, [#allocation7], 64, 64, 4
    $region9: #{tpu_custom_call.1} parent=1 // pred_fallthru
      _
    // Predicated region
    $region10: #{tpu_custom_call.1} parent=1 // pred_check
      _
    $region11: #{tpu_custom_call.1} parent=1 // pred_check_branch
      %39 = sbr.rel (0) target = $region13
    $region12: #{tpu_custom_call.1} parent=1 // pred_region
      %41 = vsyncadd [#allocation7], 0
      %s42 = sshll.u32 %s2, 4
      %s43 = int_to_ptr.hbm [resolvable:$true] %s42
      %s44 = sshll.u32 [#allocation8], 4
      %s45 = int_to_ptr.vmem [resolvable:$true] %s44
      %50 = dma.hbm_to_vmem [thread:$0]  %s43, 2048, %s45, [#allocation7], 128, 128, 8
    $region13: #{tpu_custom_call.1} parent=1 // pred_fallthru
      _
    // Predicated region
    $region14: #{tpu_custom_call.1} parent=1 // pred_check
      _
    $region15: #{tpu_custom_call.1} parent=1 // pred_check_branch
      %52 = sbr.rel (0) target = $region17
    $region16: #{tpu_custom_call.1} parent=1 // pred_region
      _
    $region17: #{tpu_custom_call.1} parent=1 // pred_fallthru
      _
    // Predicated region
    $region18: #{tpu_custom_call.1} parent=1 // pred_check
      _
    $region19: #{tpu_custom_call.1} parent=1 // pred_check_branch
      %54 = sbr.rel (0) target = $region21
    $region20: #{tpu_custom_call.1} parent=1 // pred_region
      %56 = dma.done [#allocation4], 1024
    $region21: #{tpu_custom_call.1} parent=1 // pred_fallthru
      _
    // Predicated region
    $region22: #{tpu_custom_call.1} parent=1 // pred_check
      _
    $region23: #{tpu_custom_call.1} parent=1 // pred_check_branch
      %58 = sbr.rel (0) target = $region25
    $region24: #{tpu_custom_call.1} parent=1 // pred_region
      %60 = dma.done [#allocation7], 1024
    $region25: #{tpu_custom_call.1} parent=1 // pred_fallthru
      _
    // Predicated region
    $region26: #{tpu_custom_call.1} parent=1 // pred_check
      _
    $region27: #{tpu_custom_call.1} parent=1 // pred_check_branch
      %62 = sbr.rel (0) target = $region29
    $region28: #{tpu_custom_call.1} parent=1 // pred_region
      %64 = dma.done [#allocation7], 2048
    $region29: #{tpu_custom_call.1} parent=1 // pred_fallthru
      _
    %p65 = scmp.eq.s32.totalorder 0, 0
    // Predicated region
    $region30: #{tpu_custom_call.1} parent=1 // pred_check
      %p66 = pneg %p65
    $region31: #{tpu_custom_call.1} parent=1 // pred_check_branch
      %68 = sbr.rel (%p66) target = $region33
    $region32: #{tpu_custom_call.1} parent=1 // pred_region
      %69 = vst [vmem:[#allocation2] sm:$0xff] 0.0
      %70 = vst [vmem:[#allocation2 + $0x8] sm:$0xff] 0.0
      %71 = vst [vmem:[#allocation2 + $0x10] sm:$0xff] 0.0
      %72 = vst [vmem:[#allocation2 + $0x18] sm:$0xff] 0.0
      %73 = vst [vmem:[#allocation2 + $0x20] sm:$0xff] 0.0
      %74 = vst [vmem:[#allocation2 + $0x28] sm:$0xff] 0.0
      %75 = vst [vmem:[#allocation2 + $0x30] sm:$0xff] 0.0
      %76 = vst [vmem:[#allocation2 + $0x38] sm:$0xff] 0.0
      %77 = vst [vmem:[#allocation2 + $0x40] sm:$0xff] 0.0
      %78 = vst [vmem:[#allocation2 + $0x48] sm:$0xff] 0.0
      %79 = vst [vmem:[#allocation2 + $0x50] sm:$0xff] 0.0
      %80 = vst [vmem:[#allocation2 + $0x58] sm:$0xff] 0.0
      %81 = vst [vmem:[#allocation2 + $0x60] sm:$0xff] 0.0
      %82 = vst [vmem:[#allocation2 + $0x68] sm:$0xff] 0.0
      %83 = vst [vmem:[#allocation2 + $0x70] sm:$0xff] 0.0
      %84 = vst [vmem:[#allocation2 + $0x78] sm:$0xff] 0.0
    $region33: #{tpu_custom_call.1} parent=1 // pred_fallthru
      _
    %v85 = vld [vmem:[#allocation2] sm:$0xff]
    %v86 = vld [vmem:[#allocation2 + $0x8] sm:$0xff]
    %v87 = vld [vmem:[#allocation2 + $0x10] sm:$0xff]
    %v88 = vld [vmem:[#allocation2 + $0x18] sm:$0xff]
    %v89 = vld [vmem:[#allocation2 + $0x20] sm:$0xff]
    %v90 = vld [vmem:[#allocation2 + $0x28] sm:$0xff]
    %v91 = vld [vmem:[#allocation2 + $0x30] sm:$0xff]
    %v92 = vld [vmem:[#allocation2 + $0x38] sm:$0xff]
    %v93 = vld [vmem:[#allocation2 + $0x40] sm:$0xff]
    %v94 = vld [vmem:[#allocation2 + $0x48] sm:$0xff]
    %v95 = vld [vmem:[#allocation2 + $0x50] sm:$0xff]
    %v96 = vld [vmem:[#allocation2 + $0x58] sm:$0xff]
    %v97 = vld [vmem:[#allocation2 + $0x60] sm:$0xff]
    %v98 = vld [vmem:[#allocation2 + $0x68] sm:$0xff]
    %v99 = vld [vmem:[#allocation2 + $0x70] sm:$0xff]
    %v100 = vld [vmem:[#allocation2 + $0x78] sm:$0xff]
    %v101 = vld [vmem:[#allocation3] sm:$0xf]
    %v102 = vld [vmem:[#allocation3 + $0x4] sm:$0xf]
    %v103 = vld [vmem:[#allocation3 + $0x8] sm:$0xf]
    %v104 = vld [vmem:[#allocation3 + $0xc] sm:$0xf]
    %v105 = vld [vmem:[#allocation3 + $0x10] sm:$0xf]
    %v106 = vld [vmem:[#allocation3 + $0x14] sm:$0xf]
    %v107 = vld [vmem:[#allocation3 + $0x18] sm:$0xf]
    %v108 = vld [vmem:[#allocation3 + $0x1c] sm:$0xf]
    %v109 = vld [vmem:[#allocation3 + $0x20] sm:$0xf]
    %v110 = vld [vmem:[#allocation3 + $0x24] sm:$0xf]
    %v111 = vld [vmem:[#allocation3 + $0x28] sm:$0xf]
    %v112 = vld [vmem:[#allocation3 + $0x2c] sm:$0xf]
    %v113 = vld [vmem:[#allocation3 + $0x30] sm:$0xf]
    %v114 = vld [vmem:[#allocation3 + $0x34] sm:$0xf]
    %v115 = vld [vmem:[#allocation3 + $0x38] sm:$0xf]
    %v116 = vld [vmem:[#allocation3 + $0x3c] sm:$0xf]
    %v117 = vld [vmem:[#allocation6] sm:$0xf]
    %v118 = vld [vmem:[#allocation6 + $0x4] sm:$0xf]
    %v119 = vld [vmem:[#allocation6 + $0x8] sm:$0xf]
    %v120 = vld [vmem:[#allocation6 + $0xc] sm:$0xf]
    %v121 = vld [vmem:[#allocation6 + $0x10] sm:$0xf]
    %v122 = vld [vmem:[#allocation6 + $0x14] sm:$0xf]
    %v123 = vld [vmem:[#allocation6 + $0x18] sm:$0xf]
    %v124 = vld [vmem:[#allocation6 + $0x1c] sm:$0xf]
    %v125 = vld [vmem:[#allocation6 + $0x20] sm:$0xf]
    %v126 = vld [vmem:[#allocation6 + $0x24] sm:$0xf]
    %v127 = vld [vmem:[#allocation6 + $0x28] sm:$0xf]
    %v128 = vld [vmem:[#allocation6 + $0x2c] sm:$0xf]
    %v129 = vld [vmem:[#allocation6 + $0x30] sm:$0xf]
    %v130 = vld [vmem:[#allocation6 + $0x34] sm:$0xf]
    %v131 = vld [vmem:[#allocation6 + $0x38] sm:$0xf]
    %v132 = vld [vmem:[#allocation6 + $0x3c] sm:$0xf]
    %v149 = vunpack.c.l.b16 %v101
    %v150 = vunpack.c.l.b16 %v102
    %v151 = vunpack.c.l.b16 %v103
    %v152 = vunpack.c.l.b16 %v104
    %v153 = vunpack.c.l.b16 %v105
    %v154 = vunpack.c.l.b16 %v106
    %v155 = vunpack.c.l.b16 %v107
    %v156 = vunpack.c.l.b16 %v108
    %v157 = vunpack.c.l.b16 %v109
    %v158 = vunpack.c.l.b16 %v110
    %v159 = vunpack.c.l.b16 %v111
    %v160 = vunpack.c.l.b16 %v112
    %v161 = vunpack.c.l.b16 %v113
    %v162 = vunpack.c.l.b16 %v114
    %v163 = vunpack.c.l.b16 %v115
    %v164 = vunpack.c.l.b16 %v116
    %v165 = vpack.c.b16 %v150, %v149
    %v166 = vpack.c.b16 %v152, %v151
    %v167 = vpack.c.b16 %v154, %v153
    %v168 = vpack.c.b16 %v156, %v155
    %v169 = vpack.c.b16 %v158, %v157
    %v170 = vpack.c.b16 %v160, %v159
    %v171 = vpack.c.b16 %v162, %v161
    %v172 = vpack.c.b16 %v164, %v163
    %v197 = vunpack.c.l.b16 %v117
    %v198 = vunpack.c.l.b16 %v118
    %v199 = vunpack.c.l.b16 %v119
    %v200 = vunpack.c.l.b16 %v120
    %v201 = vunpack.c.l.b16 %v121
    %v202 = vunpack.c.l.b16 %v122
    %v203 = vunpack.c.l.b16 %v123
    %v204 = vunpack.c.l.b16 %v124
    %v205 = vunpack.c.l.b16 %v125
    %v206 = vunpack.c.l.b16 %v126
    %v207 = vunpack.c.l.b16 %v127
    %v208 = vunpack.c.l.b16 %v128
    %v209 = vunpack.c.l.b16 %v129
    %v210 = vunpack.c.l.b16 %v130
    %v211 = vunpack.c.l.b16 %v131
    %v212 = vunpack.c.l.b16 %v132
    %v213 = vpack.c.b16 %v198, %v197
    %v214 = vpack.c.b16 %v200, %v199
    %v215 = vpack.c.b16 %v202, %v201
    %v216 = vpack.c.b16 %v204, %v203
    %v217 = vpack.c.b16 %v206, %v205
    %v218 = vpack.c.b16 %v208, %v207
    %v219 = vpack.c.b16 %v210, %v209
    %v220 = vpack.c.b16 %v212, %v211
    %229 = vmatpush.bf16.msra.mxu0 %v220
    %230 = vmatpush.bf16.msra.mxu0 %v219
    %231 = vmatpush.bf16.msra.mxu0 %v218
    %232 = vmatpush.bf16.msra.mxu0 %v217
    %233 = vmatpush.bf16.msra.mxu0 %v216
    %234 = vmatpush.bf16.msra.mxu0 %v215
    %235 = vmatpush.bf16.msra.mxu0 %v214
    %236 = vmatpush.bf16.msra.mxu0 %v213
    %237 = vmatmul.bf16.gmra.mxu0 %v165
    %v238 = vpop.f32.mrf.mxu0
    %v239 = vadd.f32 0.0, %v238
    %v240 = vpop.f32.mrf.mxu0
    %v241 = vadd.f32 0.0, %v240
    %242 = vmatmul.bf16.gmra.mxu0 %v166
    %v243 = vpop.f32.mrf.mxu0
    %v244 = vadd.f32 0.0, %v243
    %v245 = vpop.f32.mrf.mxu0
    %v246 = vadd.f32 0.0, %v245
    %247 = vmatmul.bf16.gmra.mxu0 %v167
    %v248 = vpop.f32.mrf.mxu0
    %v249 = vadd.f32 0.0, %v248
    %v250 = vpop.f32.mrf.mxu0
    %v251 = vadd.f32 0.0, %v250
    %252 = vmatmul.bf16.gmra.mxu0 %v168
    %v253 = vpop.f32.mrf.mxu0
    %v254 = vadd.f32 0.0, %v253
    %v255 = vpop.f32.mrf.mxu0
    %v256 = vadd.f32 0.0, %v255
    %257 = vmatmul.bf16.gmra.mxu0 %v169
    %v258 = vpop.f32.mrf.mxu0
    %v259 = vadd.f32 0.0, %v258
    %v260 = vpop.f32.mrf.mxu0
    %v261 = vadd.f32 0.0, %v260
    %262 = vmatmul.bf16.gmra.mxu0 %v170
    %v263 = vpop.f32.mrf.mxu0
    %v264 = vadd.f32 0.0, %v263
    %v265 = vpop.f32.mrf.mxu0
    %v266 = vadd.f32 0.0, %v265
    %267 = vmatmul.bf16.gmra.mxu0 %v171
    %v268 = vpop.f32.mrf.mxu0
    %v269 = vadd.f32 0.0, %v268
    %v270 = vpop.f32.mrf.mxu0
    %v271 = vadd.f32 0.0, %v270
    %272 = vmatmul.bf16.gmra.mxu0 %v172
    %v273 = vpop.f32.mrf.mxu0
    %v274 = vadd.f32 0.0, %v273
    %v275 = vpop.f32.mrf.mxu0
    %v276 = vadd.f32 0.0, %v275
    %277 = vdwg.mxu0
    %v278 = vadd.f32 %v85, %v239
    %v279 = vadd.f32 %v86, %v241
    %v280 = vadd.f32 %v87, %v244
    %v281 = vadd.f32 %v88, %v246
    %v282 = vadd.f32 %v89, %v249
    %v283 = vadd.f32 %v90, %v251
    %v284 = vadd.f32 %v91, %v254
    %v285 = vadd.f32 %v92, %v256
    %v286 = vadd.f32 %v93, %v259
    %v287 = vadd.f32 %v94, %v261
    %v288 = vadd.f32 %v95, %v264
    %v289 = vadd.f32 %v96, %v266
    %v290 = vadd.f32 %v97, %v269
    %v291 = vadd.f32 %v98, %v271
    %v292 = vadd.f32 %v99, %v274
    %v293 = vadd.f32 %v100, %v276
    %294 = vst [vmem:[#allocation2] sm:$0xff] %v278
    %295 = vst [vmem:[#allocation2 + $0x8] sm:$0xff] %v279
    %296 = vst [vmem:[#allocation2 + $0x10] sm:$0xff] %v280
    %297 = vst [vmem:[#allocation2 + $0x18] sm:$0xff] %v281
    %298 = vst [vmem:[#allocation2 + $0x20] sm:$0xff] %v282
    %299 = vst [vmem:[#allocation2 + $0x28] sm:$0xff] %v283
    %300 = vst [vmem:[#allocation2 + $0x30] sm:$0xff] %v284
    %301 = vst [vmem:[#allocation2 + $0x38] sm:$0xff] %v285
    %302 = vst [vmem:[#allocation2 + $0x40] sm:$0xff] %v286
    %303 = vst [vmem:[#allocation2 + $0x48] sm:$0xff] %v287
    %304 = vst [vmem:[#allocation2 + $0x50] sm:$0xff] %v288
    %305 = vst [vmem:[#allocation2 + $0x58] sm:$0xff] %v289
    %306 = vst [vmem:[#allocation2 + $0x60] sm:$0xff] %v290
    %307 = vst [vmem:[#allocation2 + $0x68] sm:$0xff] %v291
    %308 = vst [vmem:[#allocation2 + $0x70] sm:$0xff] %v292
    %309 = vst [vmem:[#allocation2 + $0x78] sm:$0xff] %v293
    // Predicated region
    $region34: #{tpu_custom_call.1} parent=1 // pred_check
      %p310 = pneg %p65
    $region35: #{tpu_custom_call.1} parent=1 // pred_check_branch
      %312 = sbr.rel (%p310) target = $region37
    $region36: #{tpu_custom_call.1} parent=1 // pred_region
      %v313 = vld [vmem:[#allocation2] sm:$0xff]
      %v314 = vld [vmem:[#allocation2 + $0x8] sm:$0xff]
      %v315 = vld [vmem:[#allocation2 + $0x10] sm:$0xff]
      %v316 = vld [vmem:[#allocation2 + $0x18] sm:$0xff]
      %v317 = vld [vmem:[#allocation2 + $0x20] sm:$0xff]
      %v318 = vld [vmem:[#allocation2 + $0x28] sm:$0xff]
      %v319 = vld [vmem:[#allocation2 + $0x30] sm:$0xff]
      %v320 = vld [vmem:[#allocation2 + $0x38] sm:$0xff]
      %v321 = vld [vmem:[#allocation2 + $0x40] sm:$0xff]
      %v322 = vld [vmem:[#allocation2 + $0x48] sm:$0xff]
      %v323 = vld [vmem:[#allocation2 + $0x50] sm:$0xff]
      %v324 = vld [vmem:[#allocation2 + $0x58] sm:$0xff]
      %v325 = vld [vmem:[#allocation2 + $0x60] sm:$0xff]
      %v326 = vld [vmem:[#allocation2 + $0x68] sm:$0xff]
      %v327 = vld [vmem:[#allocation2 + $0x70] sm:$0xff]
      %v328 = vld [vmem:[#allocation2 + $0x78] sm:$0xff]
      %v329 = vld [vmem:[#allocation8] sm:$0xff]
      %v330 = vld [vmem:[#allocation8 + $0x8] sm:$0xff]
      %v331 = vld [vmem:[#allocation8 + $0x10] sm:$0xff]
      %v332 = vld [vmem:[#allocation8 + $0x18] sm:$0xff]
      %v333 = vld [vmem:[#allocation8 + $0x20] sm:$0xff]
      %v334 = vld [vmem:[#allocation8 + $0x28] sm:$0xff]
      %v335 = vld [vmem:[#allocation8 + $0x30] sm:$0xff]
      %v336 = vld [vmem:[#allocation8 + $0x38] sm:$0xff]
      %v337 = vld [vmem:[#allocation8 + $0x40] sm:$0xff]
      %v338 = vld [vmem:[#allocation8 + $0x48] sm:$0xff]
      %v339 = vld [vmem:[#allocation8 + $0x50] sm:$0xff]
      %v340 = vld [vmem:[#allocation8 + $0x58] sm:$0xff]
      %v341 = vld [vmem:[#allocation8 + $0x60] sm:$0xff]
      %v342 = vld [vmem:[#allocation8 + $0x68] sm:$0xff]
      %v343 = vld [vmem:[#allocation8 + $0x70] sm:$0xff]
      %v344 = vld [vmem:[#allocation8 + $0x78] sm:$0xff]
      %v345 = vld [vmem:[%s3] sm:$0x1]
      %v347 = vperm.slane %v345, 0
      %349 = vmatpush.msra.mxu0 %v344
      %350 = vmatpush.msra.mxu0 %v343
      %351 = vmatpush.msra.mxu0 %v342
      %352 = vmatpush.msra.mxu0 %v341
      %353 = vmatpush.msra.mxu0 %v340
      %354 = vmatpush.msra.mxu0 %v339
      %355 = vmatpush.msra.mxu0 %v338
      %356 = vmatpush.msra.mxu0 %v337
      %357 = vmatpush.msra.mxu0 %v336
      %358 = vmatpush.msra.mxu0 %v335
      %359 = vmatpush.msra.mxu0 %v334
      %360 = vmatpush.msra.mxu0 %v333
      %361 = vmatpush.msra.mxu0 %v332
      %362 = vmatpush.msra.mxu0 %v331
      %363 = vmatpush.msra.mxu0 %v330
      %364 = vmatpush.msra.mxu0 %v329
      %365 = vmatmul.f32.gmra.mxu0 %v313
      %v366 = vpop.f32.mrf.mxu0
      %v367 = vadd.f32 %v347, %v366
      %368 = vmatmul.f32.gmra.mxu0 %v314
      %v369 = vpop.f32.mrf.mxu0
      %v370 = vadd.f32 %v347, %v369
      %371 = vmatmul.f32.gmra.mxu0 %v315
      %v372 = vpop.f32.mrf.mxu0
      %v373 = vadd.f32 %v347, %v372
      %374 = vmatmul.f32.gmra.mxu0 %v316
      %v375 = vpop.f32.mrf.mxu0
      %v376 = vadd.f32 %v347, %v375
      %377 = vmatmul.f32.gmra.mxu0 %v317
      %v378 = vpop.f32.mrf.mxu0
      %v379 = vadd.f32 %v347, %v378
      %380 = vmatmul.f32.gmra.mxu0 %v318
      %v381 = vpop.f32.mrf.mxu0
      %v382 = vadd.f32 %v347, %v381
      %383 = vmatmul.f32.gmra.mxu0 %v319
      %v384 = vpop.f32.mrf.mxu0
      %v385 = vadd.f32 %v347, %v384
      %386 = vmatmul.f32.gmra.mxu0 %v320
      %v387 = vpop.f32.mrf.mxu0
      %v388 = vadd.f32 %v347, %v387
      %389 = vmatmul.f32.gmra.mxu0 %v321
      %v390 = vpop.f32.mrf.mxu0
      %v391 = vadd.f32 %v347, %v390
      %392 = vmatmul.f32.gmra.mxu0 %v322
      %v393 = vpop.f32.mrf.mxu0
      %v394 = vadd.f32 %v347, %v393
      %395 = vmatmul.f32.gmra.mxu0 %v323
      %v396 = vpop.f32.mrf.mxu0
      %v397 = vadd.f32 %v347, %v396
      %398 = vmatmul.f32.gmra.mxu0 %v324
      %v399 = vpop.f32.mrf.mxu0
      %v400 = vadd.f32 %v347, %v399
      %401 = vmatmul.f32.gmra.mxu0 %v325
      %v402 = vpop.f32.mrf.mxu0
      %v403 = vadd.f32 %v347, %v402
      %404 = vmatmul.f32.gmra.mxu0 %v326
      %v405 = vpop.f32.mrf.mxu0
      %v406 = vadd.f32 %v347, %v405
      %407 = vmatmul.f32.gmra.mxu0 %v327
      %v408 = vpop.f32.mrf.mxu0
      %v409 = vadd.f32 %v347, %v408
      %410 = vmatmul.f32.gmra.mxu0 %v328
      %v411 = vpop.f32.mrf.mxu0
      %v412 = vadd.f32 %v347, %v411
      %413 = vdwg.mxu0
      %vm414 = vcmp.gt.f32.partialorder %v367, 0.0
      %vm415 = vcmp.gt.f32.partialorder %v370, 0.0
      %vm416 = vcmp.gt.f32.partialorder %v373, 0.0
      %vm417 = vcmp.gt.f32.partialorder %v376, 0.0
      %vm418 = vcmp.gt.f32.partialorder %v379, 0.0
      %vm419 = vcmp.gt.f32.partialorder %v382, 0.0
      %vm420 = vcmp.gt.f32.partialorder %v385, 0.0
      %vm421 = vcmp.gt.f32.partialorder %v388, 0.0
      %vm422 = vcmp.gt.f32.partialorder %v391, 0.0
      %vm423 = vcmp.gt.f32.partialorder %v394, 0.0
      %vm424 = vcmp.gt.f32.partialorder %v397, 0.0
      %vm425 = vcmp.gt.f32.partialorder %v400, 0.0
      %vm426 = vcmp.gt.f32.partialorder %v403, 0.0
      %vm427 = vcmp.gt.f32.partialorder %v406, 0.0
      %vm428 = vcmp.gt.f32.partialorder %v409, 0.0
      %vm429 = vcmp.gt.f32.partialorder %v412, 0.0
      %v430 = vmul.f32 %v367, 0.25
      %v431 = vmul.f32 %v370, 0.25
      %v432 = vmul.f32 %v373, 0.25
      %v433 = vmul.f32 %v376, 0.25
      %v434 = vmul.f32 %v379, 0.25
      %v435 = vmul.f32 %v382, 0.25
      %v436 = vmul.f32 %v385, 0.25
      %v437 = vmul.f32 %v388, 0.25
      %v438 = vmul.f32 %v391, 0.25
      %v439 = vmul.f32 %v394, 0.25
      %v440 = vmul.f32 %v397, 0.25
      %v441 = vmul.f32 %v400, 0.25
      %v442 = vmul.f32 %v403, 0.25
      %v443 = vmul.f32 %v406, 0.25
      %v444 = vmul.f32 %v409, 0.25
      %v445 = vmul.f32 %v412, 0.25
      %v446 = vsel %vm414, %v367, %v430
      %v447 = vsel %vm415, %v370, %v431
      %v448 = vsel %vm416, %v373, %v432
      %v449 = vsel %vm417, %v376, %v433
      %v450 = vsel %vm418, %v379, %v434
      %v451 = vsel %vm419, %v382, %v435
      %v452 = vsel %vm420, %v385, %v436
      %v453 = vsel %vm421, %v388, %v437
      %v454 = vsel %vm422, %v391, %v438
      %v455 = vsel %vm423, %v394, %v439
      %v456 = vsel %vm424, %v397, %v440
      %v457 = vsel %vm425, %v400, %v441
      %v458 = vsel %vm426, %v403, %v442
      %v459 = vsel %vm427, %v406, %v443
      %v460 = vsel %vm428, %v409, %v444
      %v461 = vsel %vm429, %v412, %v445
      %v462 = vpack.c.bf16 %v446, %v446
      %v463 = vpack.c.bf16 %v447, %v447
      %v464 = vpack.c.bf16 %v448, %v448
      %v465 = vpack.c.bf16 %v449, %v449
      %v466 = vpack.c.bf16 %v450, %v450
      %v467 = vpack.c.bf16 %v451, %v451
      %v468 = vpack.c.bf16 %v452, %v452
      %v469 = vpack.c.bf16 %v453, %v453
      %v470 = vpack.c.bf16 %v454, %v454
      %v471 = vpack.c.bf16 %v455, %v455
      %v472 = vpack.c.bf16 %v456, %v456
      %v473 = vpack.c.bf16 %v457, %v457
      %v474 = vpack.c.bf16 %v458, %v458
      %v475 = vpack.c.bf16 %v459, %v459
      %v476 = vpack.c.bf16 %v460, %v460
      %v477 = vpack.c.bf16 %v461, %v461
      %478 = vst [vmem:[#allocation9] sm:$0xf] %v462
      %479 = vst [vmem:[#allocation9 + $0x4] sm:$0xf] %v463
      %480 = vst [vmem:[#allocation9 + $0x8] sm:$0xf] %v464
      %481 = vst [vmem:[#allocation9 + $0xc] sm:$0xf] %v465
      %482 = vst [vmem:[#allocation9 + $0x10] sm:$0xf] %v466
      %483 = vst [vmem:[#allocation9 + $0x14] sm:$0xf] %v467
      %484 = vst [vmem:[#allocation9 + $0x18] sm:$0xf] %v468
      %485 = vst [vmem:[#allocation9 + $0x1c] sm:$0xf] %v469
      %486 = vst [vmem:[#allocation9 + $0x20] sm:$0xf] %v470
      %487 = vst [vmem:[#allocation9 + $0x24] sm:$0xf] %v471
      %488 = vst [vmem:[#allocation9 + $0x28] sm:$0xf] %v472
      %489 = vst [vmem:[#allocation9 + $0x2c] sm:$0xf] %v473
      %490 = vst [vmem:[#allocation9 + $0x30] sm:$0xf] %v474
      %491 = vst [vmem:[#allocation9 + $0x34] sm:$0xf] %v475
      %492 = vst [vmem:[#allocation9 + $0x38] sm:$0xf] %v476
      %493 = vst [vmem:[#allocation9 + $0x3c] sm:$0xf] %v477
    $region37: #{tpu_custom_call.1} parent=1 // pred_fallthru
      _
    // Predicated region
    $region38: #{tpu_custom_call.1} parent=1 // pred_check
      _
    $region39: #{tpu_custom_call.1} parent=1 // pred_check_branch
      %495 = sbr.rel (0) target = $region41
    $region40: #{tpu_custom_call.1} parent=1 // pred_region
      %497 = vsyncadd [#allocation5], 0
      %s498 = sshll.u32 [#allocation9], 4
      %s499 = int_to_ptr.vmem [resolvable:$true] %s498
      %s500 = sshll.u32 %s4, 4
      %s501 = int_to_ptr.hbm [resolvable:$true] %s500
      %506 = dma.vmem_to_hbm [thread:$0]  %s499, 1024, %s501, [#allocation5], 64, 64, 4
    $region41: #{tpu_custom_call.1} parent=1 // pred_fallthru
      _
    // Predicated region
    $region42: #{tpu_custom_call.1} parent=1 // pred_check
      _
    $region43: #{tpu_custom_call.1} parent=1 // pred_check_branch
      %508 = sbr.rel (0) target = $region45
    $region44: #{tpu_custom_call.1} parent=1 // pred_region
      %510 = dma.done [#allocation5], 1024
    $region45: #{tpu_custom_call.1} parent=1 // pred_fallthru
      _
    %511 = vsyncpa [#allocation4], 1
    %512 = vsyncpa [#allocation7], 1
    %513 = vsyncpa [#allocation5], 1

</llo_original>
